<compile_context>
chip_gen: v6e
topology: v6e:2x2x1
jax: 0.10.0
libtpu: 0.0.40
codegen_flags: <defaults>
</compile_context>

<pallas_src>
import functools
import math

import jax
import jax.numpy as jnp
import numpy as np
from jax.experimental import pallas as pl
from jax.experimental.pallas import tpu as pltpu

_FAR = 1e30  # sentinel bin center / node edge for padded entries -> zero overlap


def _round_up(a, b):
    return (a + b - 1) // b * b


@functools.lru_cache(maxsize=1)
def _chip_params():
    """Best-effort (VMEM capacity bytes, TensorCores per device)."""
    vmem = 128 << 20
    num_tc = 1
    kind = ""
    try:
        kind = jax.devices()[0].device_kind.lower()
    except Exception:
        pass
    if "v7" in kind or "7x" in kind:
        vmem, num_tc = 64 << 20, 2
    try:
        info = pltpu.get_tpu_info()
        cap = int(getattr(info, "vmem_capacity_bytes", 0) or 0)
        if cap > 0:
            vmem = min(vmem, cap)
    except Exception:
        pass
    return vmem, num_tc


def _bin_tiling(nbx, nby):
    """Bin padding + bin-x slab size, sized per TPU generation."""
    vmem_bytes, num_tc = _chip_params()
    nby_pad = _round_up(max(nby, 1), 128)            # lane dim -> multiple of 128
    nbx_pad8 = _round_up(max(nbx, 1), 8)             # sublane dim -> multiple of 8

    if num_tc > 1:
        # v7x: 64 MiB VMEM / 2 TCs -> keep slabs small, slab count a multiple of 2.
        out_cap = 4 << 20
    else:
        # v5e / v6e: one TC, 128 MiB VMEM -> prefer a single big slab.
        out_cap = min(16 << 20, max(4 << 20, vmem_bytes // 8))
    max_rows = max(8, (out_cap // (nby_pad * 4)) // 8 * 8)

    if num_tc > 1:
        n_slabs = max(num_tc, -(-nbx_pad8 // max_rows))
        n_slabs = _round_up(n_slabs, num_tc)                 # even slab count
        bx_tile = _round_up(-(-nbx_pad8 // n_slabs), 8)
        nbx_pad = bx_tile * n_slabs
    else:
        bx_tile = min(nbx_pad8, max_rows)                    # single slab if it fits
        nbx_pad = _round_up(nbx_pad8, bx_tile)
    return nbx_pad, nby_pad, bx_tile


def _density_kernel(flags_ref, ax_ref, ay_ref, bcx_ref, bcy_ref, dmap_ref, *,
                    half_x, half_y, use_bf16):
    """Accumulate (Px*ratio)^T @ Py for one (bin-x slab, node tile) grid point."""
    s = pl.program_id(0)
    t = pl.program_id(1)
    first = t == 0
    active = flags_ref[s, t] > 0

    # First node tile for this slab is culled -> just zero the resident block.
    @pl.when(jnp.logical_and(first, jnp.logical_not(active)))
    def _init():
        dmap_ref[...] = jnp.zeros_like(dmap_ref)

    @pl.when(active)
    def _compute():
        ax = ax_ref[...]                       # (3, TN): x_lo / x_hi / ratio, nodes on lanes
        x_lo = ax[0:1, :]
        x_hi = ax[1:2, :]
        ratio = ax[2:3, :]
        bcx = bcx_ref[...]                     # (BX, 1): bin-x centers on sublanes

        ay = ay_ref[...]                       # (TN, 2): y_lo / y_hi, nodes on sublanes
        y_lo = ay[:, 0:1]
        y_hi = ay[:, 1:2]
        bcy = bcy_ref[...]                     # (1, BY): bin-y centers on lanes

        # Overlap of each (stretched) node interval with every bin column / row.
        # Clamp in f32 so the 1e30 padded-bin sentinel never reaches bf16.
        pxr = jnp.maximum(jnp.minimum(x_hi, bcx + half_x)
                          - jnp.maximum(x_lo, bcx - half_x), 0.0) * ratio   # (BX, TN)
        py = jnp.maximum(jnp.minimum(y_hi, bcy + half_y)
                         - jnp.maximum(y_lo, bcy - half_y), 0.0)            # (TN, BY)
        if use_bf16:
            pxr = pxr.astype(jnp.bfloat16)
            py = py.astype(jnp.bfloat16)
        contrib = jnp.dot(pxr, py, preferred_element_type=jnp.float32)

        @pl.when(first)
        def _store():
            dmap_ref[...] = contrib

        @pl.when(jnp.logical_not(first))
        def _acc():
            dmap_ref[...] += contrib


def _density_map_raw(x, y, sx, sy, ox, oy, ratio, bin_center_x, bin_center_y, *,
                     nbx, nby, bin_size_x, bin_size_y, tile_n, use_bf16):
    """Dense (nbx, nby) density contribution of nodes weighted by `ratio`."""
    f32 = jnp.float32
    n = x.shape[0]
    tile_n = max(256, _round_up(int(tile_n), 128))
    n_pad = _round_up(max(n, 1), tile_n)
    nbx_pad, nby_pad, bx_tile = _bin_tiling(nbx, nby)
    n_slabs = nbx_pad // bx_tile
    n_tiles = n_pad // tile_n

    half_x = float(bin_size_x) * 0.5
    half_y = float(bin_size_y) * 0.5

    x = x.astype(f32); y = y.astype(f32)
    sx = sx.astype(f32); sy = sy.astype(f32)
    ox = ox.astype(f32); oy = oy.astype(f32)
    ratio = ratio.astype(f32)

    x_lo = x + ox
    x_hi = x_lo + sx
    y_lo = y + oy
    y_hi = y_lo + sy

    # Sort nodes by stretched left edge so node tiles have compact x ranges
    # (enables per-slab tile culling below).
    order = jnp.argsort(x_lo)
    x_lo = x_lo[order]; x_hi = x_hi[order]
    y_lo = y_lo[order]; y_hi = y_hi[order]
    ratio = ratio[order]

    pad_n = n_pad - n
    # Padded nodes: empty far-away interval + zero ratio -> exactly zero contribution
    # and never overlap any slab (so their tiles get culled).
    x_lo_p = jnp.pad(x_lo, (0, pad_n), constant_values=_FAR)
    x_hi_p = jnp.pad(x_hi, (0, pad_n), constant_values=-_FAR)
    y_lo_p = jnp.pad(y_lo, (0, pad_n), constant_values=_FAR)
    y_hi_p = jnp.pad(y_hi, (0, pad_n), constant_values=-_FAR)
    r_p = jnp.pad(ratio, (0, pad_n))

    ax = jnp.stack([x_lo_p, x_hi_p, r_p], axis=0)      # (3, n_pad)   nodes on lanes
    ay = jnp.stack([y_lo_p, y_hi_p], axis=1)           # (n_pad, 2)   nodes on sublanes

    # Padded bins use a far sentinel center -> overlap clamps to exactly zero.
    bcx_real = bin_center_x.astype(f32)
    bcy_real = bin_center_y.astype(f32)
    bcx = jnp.full((nbx_pad, 1), _FAR, f32).at[:nbx, 0].set(bcx_real)
    bcy = jnp.full((1, nby_pad), _FAR, f32).at[0, :nby].set(bcy_real)

    # Per-(slab, node-tile) overlap flags -> scalar prefetch culling.
    tile_x_min = x_lo_p.reshape(n_tiles, tile_n).min(axis=1)
    tile_x_max = x_hi_p.reshape(n_tiles, tile_n).max(axis=1)
    slab = jnp.arange(n_slabs)
    lo_bin = slab * bx_tile
    hi_bin = jnp.minimum((slab + 1) * bx_tile, nbx) - 1
    slab_is_pad = lo_bin >= nbx
    lo_bin_c = jnp.clip(lo_bin, 0, nbx - 1)
    hi_bin_c = jnp.clip(hi_bin, 0, nbx - 1)
    slab_lo = jnp.where(slab_is_pad, _FAR, bcx_real[lo_bin_c] - half_x)
    slab_hi = jnp.where(slab_is_pad, -_FAR, bcx_real[hi_bin_c] + half_x)
    flags = jnp.logical_and(tile_x_min[None, :] <= slab_hi[:, None],
                            tile_x_max[None, :] >= slab_lo[:, None]).astype(jnp.int32)

    grid = (n_slabs, n_tiles)

    kernel = functools.partial(_density_kernel, half_x=half_x, half_y=half_y,
                               use_bf16=bool(use_bf16))

    # Rough VMEM budget (padded VMEM layouts, double-buffered inputs/output).
    vmem_est = 4 * (
        2 * 8 * tile_n            # ax tiles (sublane-padded)
        + 2 * tile_n * 128        # ay tiles (lane-padded)
        + 2 * bx_tile * 128       # bcx blocks (lane-padded)
        + 2 * 8 * nby_pad         # bcy (sublane-padded)
        + 2 * bx_tile * nby_pad   # resident output block + writeback buffer
        + bx_tile * tile_n        # pxr
        + tile_n * nby_pad        # py
        + bx_tile * nby_pad       # matmul result temp
    )
    _, num_tc = _chip_params()
    gen_cap = (48 << 20) if num_tc > 1 else (100 << 20)
    vmem_limit = int(min(max(vmem_est + (16 << 20), 32 << 20), gen_cap))

    dmap = pl.pallas_call(
        kernel,
        out_shape=jax.ShapeDtypeStruct((nbx_pad, nby_pad), f32),
        grid_spec=pltpu.PrefetchScalarGridSpec(
            num_scalar_prefetch=1,
            grid=grid,
            in_specs=[
                pl.BlockSpec((3, tile_n), lambda s, t, f: (0, t)),     # ax: x_lo/x_hi/ratio
                pl.BlockSpec((tile_n, 2), lambda s, t, f: (t, 0)),     # ay: y_lo/y_hi
                pl.BlockSpec((bx_tile, 1), lambda s, t, f: (s, 0)),    # bin-x centers (slab)
                pl.BlockSpec((1, nby_pad), lambda s, t, f: (0, 0)),    # bin-y centers
            ],
            out_specs=pl.BlockSpec((bx_tile, nby_pad), lambda s, t, f: (s, 0)),
        ),
        compiler_params=pltpu.CompilerParams(
            dimension_semantics=("parallel", "arbitrary"),
            vmem_limit_bytes=vmem_limit),
    )(flags, ax, ay, bcx, bcy)

    return dmap[:nbx, :nby]


@functools.partial(jax.jit, static_argnames=(
    "nbx", "nby", "bin_size_x", "bin_size_y", "tile_n", "use_bf16"))
def _density_map_jit(x, y, sx, sy, ox, oy, ratio, bcx, bcy, *,
                     nbx, nby, bin_size_x, bin_size_y, tile_n, use_bf16):
    return _density_map_raw(x, y, sx, sy, ox, oy, ratio, bcx, bcy,
                            nbx=nbx, nby=nby, bin_size_x=bin_size_x,
                            bin_size_y=bin_size_y, tile_n=tile_n, use_bf16=use_bf16)


@functools.partial(jax.jit, static_argnames=(
    "nbx", "nby", "bin_size_x", "bin_size_y", "target_density", "tile_n", "use_bf16"))
def _overflow_forward_jit(x, y, sx, sy, ox, oy, ratio, bcx, bcy,
                          init_map, pad_mask, *,
                          nbx, nby, bin_size_x, bin_size_y, target_density,
                          tile_n, use_bf16):
    raw = _density_map_raw(x, y, sx, sy, ox, oy, ratio, bcx, bcy,
                           nbx=nbx, nby=nby, bin_size_x=bin_size_x,
                           bin_size_y=bin_size_y, tile_n=tile_n, use_bf16=use_bf16)
    bin_area = float(bin_size_x) * float(bin_size_y)
    tdba = jnp.float32(target_density * bin_area)
    dmap = init_map.astype(jnp.float32) + raw
    dmap = jnp.where(pad_mask > 0, tdba, dmap)          # padding bins force-filled
    cost = jnp.sum(jnp.maximum(dmap - tdba, 0.0)).reshape(1)
    maxd = (jnp.max(dmap) / jnp.float32(bin_area)).reshape(1)
    return dmap, cost, maxd


class ElectricOverflowPallas:
    """JAX/Pallas port of dreamplace ElectricOverflow (forward only)."""

    def __init__(self, node_size_x, node_size_y, bin_center_x, bin_center_y,
                 target_density, xl, yl, xh, yh, bin_size_x, bin_size_y,
                 num_movable_nodes, num_terminals, num_filler_nodes, padding,
                 deterministic_flag=True, sorted_node_map=None,
                 movable_macro_mask=None, tile_n=512, use_bf16_matmul=True):
        self.node_size_x = jnp.asarray(node_size_x, jnp.float32)
        self.node_size_y = jnp.asarray(node_size_y, jnp.float32)
        self.bin_center_x = jnp.asarray(bin_center_x, jnp.float32)
        self.bin_center_y = jnp.asarray(bin_center_y, jnp.float32)
        self.target_density = float(target_density)
        self.xl, self.yl, self.xh, self.yh = map(float, (xl, yl, xh, yh))
        self.bin_size_x = float(bin_size_x)
        self.bin_size_y = float(bin_size_y)
        self.num_movable_nodes = int(num_movable_nodes)
        self.num_terminals = int(num_terminals)
        self.num_filler_nodes = int(num_filler_nodes)
        self.padding = int(padding)
        # deterministic_flag / sorted_node_map only affect traversal order in the
        # original CPU/CUDA scatter; the dense MXU formulation has its own fixed
        # reduction order (nodes are re-sorted by x internally for slab culling).
        self.deterministic_flag = deterministic_flag
        self.sorted_node_map = sorted_node_map
        self.movable_macro_mask = movable_macro_mask
        self.tile_n = int(tile_n)                   # sweepable: 512-1024
        self.use_bf16_matmul = bool(use_bf16_matmul)  # bf16 MXU operands, f32 accumulate
        self.reset()

    def reset(self):
        sqrt2 = math.sqrt(2.0)
        self.node_size_x_clamped = jnp.maximum(self.node_size_x, self.bin_size_x * sqrt2)
        self.offset_x = (self.node_size_x - self.node_size_x_clamped) * 0.5
        self.node_size_y_clamped = jnp.maximum(self.node_size_y, self.bin_size_y * sqrt2)
        self.offset_y = (self.node_size_y - self.node_size_y_clamped) * 0.5
        node_areas = self.node_size_x * self.node_size_y
        ratio = node_areas / (self.node_size_x_clamped * self.node_size_y_clamped)
        if self.target_density < 1 and self.movable_macro_mask is not None:
            mm = jnp.zeros(ratio.shape, bool).at[:self.num_movable_nodes].set(
                jnp.asarray(self.movable_macro_mask, bool))
            ratio = jnp.where(mm, self.target_density, ratio)
        self.ratio = ratio

        # precompute the movable+filler selection-masked ratio once (used every forward)
        num_nodes = int(self.node_size_x.shape[0])
        sel = np.zeros((num_nodes,), np.float32)
        sel[:self.num_movable_nodes] = 1.0
        if self.num_filler_nodes > 0:
            sel[num_nodes - self.num_filler_nodes:] = 1.0
        self._ratio_fwd = jax.device_put(self.ratio * jnp.asarray(sel))

        self.num_bins_x = int(round((self.xh - self.xl) / self.bin_size_x))
        self.num_bins_y = int(round((self.yh - self.yl) / self.bin_size_y))
        if self.padding > 0:
            pm = np.ones((self.num_bins_x, self.num_bins_y), np.float32)
            pm[self.padding:self.num_bins_x - self.padding,
               self.padding:self.num_bins_y - self.padding] = 0.0
            self.padding_mask = jnp.asarray(pm)
        else:
            self.padding_mask = jnp.zeros((self.num_bins_x, self.num_bins_y), jnp.float32)
        self.initial_density_map = None
        self.density_map = None

    def compute_initial_density_map(self, pos):
        num_nodes = int(self.node_size_x.shape[0])
        x = pos[:num_nodes]
        y = pos[num_nodes:]
        nm, nt = self.num_movable_nodes, self.num_terminals
        mask = np.zeros((num_nodes,), np.float32)
        if nt > 0:
            mask[nm:nm + nt] = 1.0
        zeros = jnp.zeros((num_nodes,), jnp.float32)
        # TODO(synk): the CPU/CUDA exact fixed-cell density map clips boundary bins
        # to the placement region; plain rectangle/bin overlap is used here.
        # One-time computation -> keep operands in f32 regardless of the runtime flag.
        dmap = _density_map_jit(
            x, y, self.node_size_x, self.node_size_y, zeros, zeros,
            jnp.asarray(mask), self.bin_center_x, self.bin_center_y,
            nbx=self.num_bins_x, nby=self.num_bins_y,
            bin_size_x=self.bin_size_x, bin_size_y=self.bin_size_y,
            tile_n=self.tile_n, use_bf16=False)
        self.initial_density_map = dmap * self.target_density

    def forward(self, pos):
        if self.initial_density_map is None:
            self.compute_initial_density_map(pos)
        num_nodes = int(self.node_size_x.shape[0])
        x = pos[:num_nodes]
        y = pos[num_nodes:]
        dmap, cost, maxd = _overflow_forward_jit(
            x, y, self.node_size_x_clamped, self.node_size_y_clamped,
            self.offset_x, self.offset_y, self._ratio_fwd,
            self.bin_center_x, self.bin_center_y,
            self.initial_density_map, self.padding_mask,
            nbx=self.num_bins_x, nby=self.num_bins_y,
            bin_size_x=self.bin_size_x, bin_size_y=self.bin_size_y,
            target_density=self.target_density, tile_n=self.tile_n,
            use_bf16=self.use_bf16_matmul)
        self.density_map = dmap
        return cost, maxd


def _ref_overlap(lo, size, centers, bin_size):
    lo = lo[:, None]
    hi = lo + size[:, None]
    bl = centers[None, :] - bin_size / 2
    bh = centers[None, :] + bin_size / 2
    return np.maximum(np.minimum(hi, bh) - np.maximum(lo, bl), 0.0)


if __name__ == "__main__":
    # small deterministic example
    num_movable, num_terminals, num_filler = 20, 6, 6
    num_nodes = num_movable + num_terminals + num_filler
    xl, yl, xh, yh = 0.0, 0.0, 16.0, 16.0
    num_bins_x = num_bins_y = 16
    bin_size_x = (xh - xl) / num_bins_x
    bin_size_y = (yh - yl) / num_bins_y
    target_density = 0.9
    padding = 1

    key = jax.random.PRNGKey(0)
    k1, k2, k3, k4 = jax.random.split(key, 4)
    node_size_x = jax.random.uniform(k1, (num_nodes,), minval=0.5, maxval=3.0, dtype=jnp.float32)
    node_size_y = jax.random.uniform(k2, (num_nodes,), minval=0.5, maxval=3.0, dtype=jnp.float32)
    pos_x = jax.random.uniform(k3, (num_nodes,), minval=xl, maxval=xh - 3.0, dtype=jnp.float32)
    pos_y = jax.random.uniform(k4, (num_nodes,), minval=yl, maxval=yh - 3.0, dtype=jnp.float32)
    pos = jnp.concatenate([pos_x, pos_y])

    bin_center_x = jnp.asarray(xl + (np.arange(num_bins_x) + 0.5) * bin_size_x, jnp.float32)
    bin_center_y = jnp.asarray(yl + (np.arange(num_bins_y) + 0.5) * bin_size_y, jnp.float32)

    common_args = (node_size_x, node_size_y, bin_center_x, bin_center_y,
                   target_density, xl, yl, xh, yh, bin_size_x, bin_size_y,
                   num_movable, num_terminals, num_filler, padding)

    # exact (f32-operand) path
    op_f32 = ElectricOverflowPallas(*common_args, deterministic_flag=True,
                                    sorted_node_map=None, movable_macro_mask=None,
                                    use_bf16_matmul=False)
    cost, maxd = op_f32.forward(pos)
    jax.block_until_ready((cost, maxd, op_f32.density_map))

    # fast bf16-operand path (validated against the f32 path below)
    op_bf16 = ElectricOverflowPallas(*common_args, deterministic_flag=True,
                                     sorted_node_map=None, movable_macro_mask=None,
                                     use_bf16_matmul=True)
    cost_b, maxd_b = op_bf16.forward(pos)
    jax.block_until_ready((cost_b, maxd_b, op_bf16.density_map))

    # ---- pure-numpy reference ----
    nsx = np.asarray(node_size_x); nsy = np.asarray(node_size_y)
    px_ = np.asarray(pos_x); py_ = np.asarray(pos_y)
    bcx = np.asarray(bin_center_x); bcy = np.asarray(bin_center_y)
    sqrt2 = math.sqrt(2.0)
    nsx_c = np.maximum(nsx, bin_size_x * sqrt2)
    nsy_c = np.maximum(nsy, bin_size_y * sqrt2)
    off_x = (nsx - nsx_c) * 0.5
    off_y = (nsy - nsy_c) * 0.5
    ratio = (nsx * nsy) / (nsx_c * nsy_c)
    bin_area = bin_size_x * bin_size_y

    # fixed cells (terminals)
    t0, t1 = num_movable, num_movable + num_terminals
    Pxf = _ref_overlap(px_[t0:t1], nsx[t0:t1], bcx, bin_size_x)
    Pyf = _ref_overlap(py_[t0:t1], nsy[t0:t1], bcy, bin_size_y)
    init_ref = target_density * (Pxf.T @ Pyf)

    # movable + filler (stretched)
    sel = np.zeros(num_nodes, np.float32)
    sel[:num_movable] = 1.0
    sel[num_nodes - num_filler:] = 1.0
    Pxm = _ref_overlap(px_ + off_x, nsx_c, bcx, bin_size_x)
    Pym = _ref_overlap(py_ + off_y, nsy_c, bcy, bin_size_y)
    dmap_ref = init_ref + (Pxm * (ratio * sel)[:, None]).T @ Pym
    pm = np.ones((num_bins_x, num_bins_y), np.float32)
    pm[padding:num_bins_x - padding, padding:num_bins_y - padding] = 0.0
    dmap_ref = np.where(pm > 0, target_density * bin_area, dmap_ref)
    cost_ref = np.maximum(dmap_ref - target_density * bin_area, 0.0).sum()
    maxd_ref = dmap_ref.max() / bin_area

    # f32 path vs numpy (tight)
    assert np.allclose(np.asarray(op_f32.density_map), dmap_ref, rtol=1e-5, atol=1e-4), "density map mismatch"
    assert np.allclose(np.asarray(cost)[0], cost_ref, rtol=1e-5, atol=1e-4), "overflow cost mismatch"
    assert np.allclose(np.asarray(maxd)[0], maxd_ref, rtol=1e-5, atol=1e-4), "max density mismatch"

    # bf16 path vs f32 path (operand rounding only; accumulation stays f32)
    assert np.allclose(np.asarray(op_bf16.density_map), np.asarray(op_f32.density_map),
                       rtol=2e-2, atol=2e-2), "bf16 density map mismatch"
    assert np.allclose(np.asarray(cost_b)[0], np.asarray(cost)[0], rtol=5e-2, atol=0.5), "bf16 cost mismatch"
    assert np.allclose(np.asarray(maxd_b)[0], np.asarray(maxd)[0], rtol=5e-2, atol=0.1), "bf16 max density mismatch"

    print("KERNEL_OK")
</pallas_src>

<mosaic_0001>
module attributes {stable_mosaic.version = 11 : i64} {
  func.func @_density_kernel(%arg0: i32, %arg1: i32, %arg2: memref<1x1xi32, #tpu.memory_space<smem>>, %arg3: memref<3x512xf32, #tpu.memory_space<vmem>>, %arg4: memref<512x2xf32, #tpu.memory_space<vmem>>, %arg5: memref<16x1xf32, #tpu.memory_space<vmem>>, %arg6: memref<1x128xf32, #tpu.memory_space<vmem>>, %arg7: memref<16x128xf32, #tpu.memory_space<vmem>>) attributes {dimension_semantics = [#tpu.dimension_semantics<parallel>, #tpu.dimension_semantics<arbitrary>], iteration_bounds = array<i64: 1, 1>, scalar_prefetch = 1 : i64, scratch_operands = 0 : i64, tpu.core_type = #tpu.core_type<tc>, window_params = [{transform_indices = @transform_0, window_bounds = array<i64: 3, 512>}, {transform_indices = @transform_1, window_bounds = array<i64: 512, 2>}, {transform_indices = @transform_2, window_bounds = array<i64: 16, 1>}, {pipeline_mode = #tpu.pipeline_mode<synchronous>, transform_indices = @transform_3, window_bounds = array<i64: 1, 128>}, {transform_indices = @transform_4, window_bounds = array<i64: 16, 128>}]} {
    %c0_i32 = arith.constant 0 : i32
    %0 = arith.cmpi eq, %arg1, %c0_i32 : i32
    %1 = arith.index_cast %arg0 : i32 to index
    %2 = arith.index_cast %arg1 : i32 to index
    %3 = memref.load %arg2[%1, %2] : memref<1x1xi32, #tpu.memory_space<smem>>
    %c0_i32_0 = arith.constant 0 : i32
    %4 = arith.cmpi sgt, %3, %c0_i32_0 : i32
    %true = arith.constant true
    %5 = arith.xori %4, %true : i1
    %6 = arith.andi %0, %5 : i1
    %7 = arith.extui %6 : i1 to i32
    %c0_i32_1 = arith.constant 0 : i32
    %8 = arith.cmpi ne, %7, %c0_i32_1 : i32
    scf.if %8 {
      %cst = arith.constant 0.000000e+00 : f32
      %11 = vector.broadcast %cst : f32 to vector<16x128xf32>
      %c0 = arith.constant 0 : index
      %c0_3 = arith.constant 0 : index
      %12 = vector.load %arg7[%c0, %c0_3] : memref<16x128xf32, #tpu.memory_space<vmem>>, vector<16x128xf32>
      tpu.vector_store %arg7[%c0, %c0_3], %11 {strides = array<i32>} : memref<16x128xf32, #tpu.memory_space<vmem>>, vector<16x128xf32>,
    } else {
    }
    %9 = arith.extui %4 : i1 to i32
    %c0_i32_2 = arith.constant 0 : i32
    %10 = arith.cmpi ne, %9, %c0_i32_2 : i32
    scf.if %10 {
      %c0 = arith.constant 0 : index
      %c0_3 = arith.constant 0 : index
      %11 = vector.load %arg3[%c0, %c0_3] : memref<3x512xf32, #tpu.memory_space<vmem>>, vector<3x512xf32>
      %12 = vector.extract_strided_slice %11 {offsets = [0, 0], sizes = [1, 512], strides = [1, 1]} : vector<3x512xf32> to vector<1x512xf32>
      %13 = vector.extract_strided_slice %11 {offsets = [1, 0], sizes = [1, 512], strides = [1, 1]} : vector<3x512xf32> to vector<1x512xf32>
      %14 = vector.extract_strided_slice %11 {offsets = [2, 0], sizes = [1, 512], strides = [1, 1]} : vector<3x512xf32> to vector<1x512xf32>
      %c0_4 = arith.constant 0 : index
      %c0_5 = arith.constant 0 : index
      %15 = vector.load %arg5[%c0_4, %c0_5] : memref<16x1xf32, #tpu.memory_space<vmem>>, vector<16x1xf32>
      %c0_6 = arith.constant 0 : index
      %c0_7 = arith.constant 0 : index
      %16 = vector.load %arg4[%c0_6, %c0_7] : memref<512x2xf32, #tpu.memory_space<vmem>>, vector<512x2xf32>
      %17 = vector.extract_strided_slice %16 {offsets = [0, 0], sizes = [512, 1], strides = [1, 1]} : vector<512x2xf32> to vector<512x1xf32>
      %18 = vector.extract_strided_slice %16 {offsets = [0, 1], sizes = [512, 1], strides = [1, 1]} : vector<512x2xf32> to vector<512x1xf32>
      %c0_8 = arith.constant 0 : index
      %c0_9 = arith.constant 0 : index
      %19 = vector.load %arg6[%c0_8, %c0_9] : memref<1x128xf32, #tpu.memory_space<vmem>>, vector<1x128xf32>
      %cst = arith.constant 5.000000e-01 : f32
      %20 = vector.broadcast %cst : f32 to vector<16x1xf32>
      %21 = arith.addf %15, %20 : vector<16x1xf32>
      %22 = vector.broadcast %13 : vector<1x512xf32> to vector<16x512xf32>
      %23 = vector.broadcast %21 : vector<16x1xf32> to vector<16x512xf32>
      %24 = arith.minimumf %22, %23 : vector<16x512xf32>
      %cst_10 = arith.constant 5.000000e-01 : f32
      %25 = vector.broadcast %cst_10 : f32 to vector<16x1xf32>
      %26 = arith.subf %15, %25 : vector<16x1xf32>
      %27 = vector.broadcast %12 : vector<1x512xf32> to vector<16x512xf32>
      %28 = vector.broadcast %26 : vector<16x1xf32> to vector<16x512xf32>
      %29 = arith.maximumf %27, %28 : vector<16x512xf32>
      %30 = arith.subf %24, %29 : vector<16x512xf32>
      %cst_11 = arith.constant 0.000000e+00 : f32
      %31 = vector.broadcast %cst_11 : f32 to vector<16x512xf32>
      %32 = arith.maximumf %30, %31 : vector<16x512xf32>
      %33 = vector.broadcast %14 : vector<1x512xf32> to vector<16x512xf32>
      %34 = arith.mulf %32, %33 : vector<16x512xf32>
      %cst_12 = arith.constant 5.000000e-01 : f32
      %35 = vector.broadcast %cst_12 : f32 to vector<1x128xf32>
      %36 = arith.addf %19, %35 : vector<1x128xf32>
      %37 = vector.broadcast %18 : vector<512x1xf32> to vector<512x128xf32>
      %38 = vector.broadcast %36 : vector<1x128xf32> to vector<512x128xf32>
      %39 = arith.minimumf %37, %38 : vector<512x128xf32>
      %cst_13 = arith.constant 5.000000e-01 : f32
      %40 = vector.broadcast %cst_13 : f32 to vector<1x128xf32>
      %41 = arith.subf %19, %40 : vector<1x128xf32>
      %42 = vector.broadcast %17 : vector<512x1xf32> to vector<512x128xf32>
      %43 = vector.broadcast %41 : vector<1x128xf32> to vector<512x128xf32>
      %44 = arith.maximumf %42, %43 : vector<512x128xf32>
      %45 = arith.subf %39, %44 : vector<512x128xf32>
      %cst_14 = arith.constant 0.000000e+00 : f32
      %46 = vector.broadcast %cst_14 : f32 to vector<512x128xf32>
      %47 = arith.maximumf %45, %46 : vector<512x128xf32>
      %cst_15 = arith.constant dense<0.000000e+00> : vector<16x128xf32>
      %48 = tpu.matmul %34, %47, %cst_15 {dimension_numbers = #tpu.dot_dimension_numbers<[1], [0], [0], [1], [0, 0, 1, 1], [], []>} : vector<16x512xf32>, vector<512x128xf32>, vector<16x128xf32> -> vector<16x128xf32>
      %49 = arith.extui %0 : i1 to i32
      %c0_i32_16 = arith.constant 0 : i32
      %50 = arith.cmpi ne, %49, %c0_i32_16 : i32
      scf.if %50 {
        %c0_19 = arith.constant 0 : index
        %c0_20 = arith.constant 0 : index
        %54 = vector.load %arg7[%c0_19, %c0_20] : memref<16x128xf32, #tpu.memory_space<vmem>>, vector<16x128xf32>
        tpu.vector_store %arg7[%c0_19, %c0_20], %48 {strides = array<i32>} : memref<16x128xf32, #tpu.memory_space<vmem>>, vector<16x128xf32>,
      } else {
      }
      %true_17 = arith.constant true
      %51 = arith.xori %0, %true_17 : i1
      %52 = arith.extui %51 : i1 to i32
      %c0_i32_18 = arith.constant 0 : i32
      %53 = arith.cmpi ne, %52, %c0_i32_18 : i32
      scf.if %53 {
        %c0_19 = arith.constant 0 : index
        %c0_20 = arith.constant 0 : index
        %54 = vector.load %arg7[%c0_19, %c0_20] : memref<16x128xf32, #tpu.memory_space<vmem>>, vector<16x128xf32>
        %55 = arith.addf %54, %48 : vector<16x128xf32>
        %c0_21 = arith.constant 0 : index
        %c0_22 = arith.constant 0 : index
        %56 = vector.load %arg7[%c0_21, %c0_22] : memref<16x128xf32, #tpu.memory_space<vmem>>, vector<16x128xf32>
        tpu.vector_store %arg7[%c0_21, %c0_22], %55 {strides = array<i32>} : memref<16x128xf32, #tpu.memory_space<vmem>>, vector<16x128xf32>,
      } else {
      }
    } else {
    }
    return
  }
  func.func @transform_0(%arg0: i32, %arg1: i32, %arg2: memref<1x1xi32, #tpu.memory_space<smem>>) -> (i32, i32) {
    %c0_i32 = arith.constant 0 : i32
    %c0_i32_0 = arith.constant 0 : i32
    return %c0_i32, %arg1 : i32, i32
  }
  func.func @transform_1(%arg0: i32, %arg1: i32, %arg2: memref<1x1xi32, #tpu.memory_space<smem>>) -> (i32, i32) {
    %c0_i32 = arith.constant 0 : i32
    %c0_i32_0 = arith.constant 0 : i32
    return %arg1, %c0_i32 : i32, i32
  }
  func.func @transform_2(%arg0: i32, %arg1: i32, %arg2: memref<1x1xi32, #tpu.memory_space<smem>>) -> (i32, i32) {
    %c0_i32 = arith.constant 0 : i32
    %c0_i32_0 = arith.constant 0 : i32
    return %arg0, %c0_i32 : i32, i32
  }
  func.func @transform_3(%arg0: i32, %arg1: i32, %arg2: memref<1x1xi32, #tpu.memory_space<smem>>) -> (i32, i32) {
    %c0_i32 = arith.constant 0 : i32
    %c0_i32_0 = arith.constant 0 : i32
    %c0_i32_1 = arith.constant 0 : i32
    return %c0_i32, %c0_i32_0 : i32, i32
  }
  func.func @transform_4(%arg0: i32, %arg1: i32, %arg2: memref<1x1xi32, #tpu.memory_space<smem>>) -> (i32, i32) {
    %c0_i32 = arith.constant 0 : i32
    %c0_i32_0 = arith.constant 0 : i32
    return %arg0, %c0_i32 : i32, i32
  }
}

</mosaic_0001>

<llo_original>
// kernel: _density_map_jit.1
$region0: #{_density_map_jit.1}
  #allocation0 [shape = 'u32[]', space=smem, size = 0x4, offset = 0x4, fixed_abs, tag = 'smem constant byte address 0x4 - core index']
  #allocation1 [shape = 'u32[144,128]{1,0:T(1,128)}', space=vmem, size = 0x12000, scoped, tag = 'internal scratch']
  #allocation2 [shape = 's32[1]{0}', space=sflag, size = 0x4, scoped, tag = 'scoped memory for _density_map_jit.1']
  #allocation3 [shape = 's32[1,1]{1,0:T(1,128)S(6)}', space=smem, size = 0x200, scoped, tag = 'prefetched SMEM operand 0']
  %s0 = inlined_call_operand.<no memory space> [shape: s32[1,1], index: 0, kind: input, shape index: {}]
  %s1 = inlined_call_operand.vmem [shape: f32[3,512], index: 1, kind: input, shape index: {}]
  %s2 = inlined_call_operand.vmem [shape: f32[512,2], index: 2, kind: input, shape index: {}]
  %s3 = inlined_call_operand.vmem [shape: f32[16,1], index: 3, kind: input, shape index: {}]
  %s4 = inlined_call_operand.vmem [shape: f32[1,128], index: 4, kind: input, shape index: {}]
  %s5 = inlined_call_operand.hbm [shape: f32[16,128], index: 5, kind: output, shape index: {}]
  %s6 = sld [smem:[#allocation0]]
  $region42: #{_density_map_jit.1} parent=0
    _
  %s8 = ssub.s32 1, %s6
  %s9 = scalar_select 0, %s8, %s6
  %10 = sst [smem:[#allocation3]] %s0
  $region1: #{_density_map_jit.1} parent=0
    #allocation4 [shape = 'u8[8192]{0}', space=vmem, size = 0x2000, scoped, tag = 'output window, operand 0, single buffered']
    #allocation5 [shape = 's32[1]{0}', space=sflag, size = 0x4, scoped, tag = 'scoped memory for _density_map_jit.1']
    %11 = vsyncpa [#allocation5], 0
    // Predicated region
    $region2: #{_density_map_jit.1} parent=1 // pred_check
      _
    $region3: #{_density_map_jit.1} parent=1 // pred_check_branch
      %13 = sbr.rel (0) target = $region5
    $region4: #{_density_map_jit.1} parent=1 // pred_region
      _
    $region5: #{_density_map_jit.1} parent=1 // pred_fallthru
      _
    // Predicated region
    $region6: #{_density_map_jit.1} parent=1 // pred_check
      _
    $region7: #{_density_map_jit.1} parent=1 // pred_check_branch
      %15 = sbr.rel (0) target = $region9
    $region8: #{_density_map_jit.1} parent=1 // pred_region
      _
    $region9: #{_density_map_jit.1} parent=1 // pred_fallthru
      _
    // Predicated region
    $region10: #{_density_map_jit.1} parent=1 // pred_check
      _
    $region11: #{_density_map_jit.1} parent=1 // pred_check_branch
      %17 = sbr.rel (0) target = $region13
    $region12: #{_density_map_jit.1} parent=1 // pred_region
      _
    $region13: #{_density_map_jit.1} parent=1 // pred_fallthru
      _
    // Predicated region
    $region14: #{_density_map_jit.1} parent=1 // pred_check
      _
    $region15: #{_density_map_jit.1} parent=1 // pred_check_branch
      %19 = sbr.rel (0) target = $region17
    $region16: #{_density_map_jit.1} parent=1 // pred_region
      _
    $region17: #{_density_map_jit.1} parent=1 // pred_fallthru
      _
    %p20 = scmp.eq.s32.totalorder 0, 0
    %s21 = sadd.s32 0, 0
    %s22 = smul.u32 %s21, 128
    %s23 = sadd.s32 %s22, 0
    %s24 = sld [smem:[#allocation3 + %s23]]
    %p25 = scmp.gt.s32.totalorder %s24, 0
    %p26 = scmp.le.s32.totalorder %s24, 0
    %p27 = pnand %p20, %p26
    %p28 = pneg %p27
    // Predicated region
    $region18: #{_density_map_jit.1} parent=1 // pred_check
      _
    $region19: #{_density_map_jit.1} parent=1 // pred_check_branch
      %30 = sbr.rel (%p27) target = $region21
    $region20: #{_density_map_jit.1} parent=1 // pred_region
      %31 = vst [vmem:[#allocation4] sm:$0xff] 0.0
      %32 = vst [vmem:[#allocation4 + $0x8] sm:$0xff] 0.0
    $region21: #{_density_map_jit.1} parent=1 // pred_fallthru
      _
    // Predicated region
    $region22: #{_density_map_jit.1} parent=1 // pred_check
      %p33 = pneg %p25
    $region23: #{_density_map_jit.1} parent=1 // pred_check_branch
      %35 = sbr.rel (%p33) target = $region25
    $region24: #{_density_map_jit.1} parent=1 // pred_region
      %v36 = vld [vmem:[%s1] sm:$0x77]
      %v37 = vld [vmem:[%s1 + $0x8] sm:$0x77]
      %v38 = vld [vmem:[%s3] sm:$0xff]
      %v39 = vld [vmem:[%s3 + $0x8] sm:$0xff]
      %v40 = vld [vmem:[%s2] sm:$0xff]
      %v41 = vld [vmem:[%s2 + $0x8] sm:$0xff]
      %v42 = vld [vmem:[%s2 + $0x10] sm:$0xff]
      %v43 = vld [vmem:[%s2 + $0x18] sm:$0xff]
      %v44 = vld [vmem:[%s2 + $0x20] sm:$0xff]
      %v45 = vld [vmem:[%s2 + $0x28] sm:$0xff]
      %v46 = vld [vmem:[%s2 + $0x30] sm:$0xff]
      %v47 = vld [vmem:[%s2 + $0x38] sm:$0xff]
      %v48 = vld [vmem:[%s2 + $0x40] sm:$0xff]
      %v49 = vld [vmem:[%s2 + $0x48] sm:$0xff]
      %v50 = vld [vmem:[%s2 + $0x50] sm:$0xff]
      %v51 = vld [vmem:[%s2 + $0x58] sm:$0xff]
      %v52 = vld [vmem:[%s2 + $0x60] sm:$0xff]
      %v53 = vld [vmem:[%s2 + $0x68] sm:$0xff]
      %v54 = vld [vmem:[%s2 + $0x70] sm:$0xff]
      %v55 = vld [vmem:[%s2 + $0x78] sm:$0xff]
      %v56 = vld [vmem:[%s2 + $0x80] sm:$0xff]
      %v57 = vld [vmem:[%s2 + $0x88] sm:$0xff]
      %v58 = vld [vmem:[%s2 + $0x90] sm:$0xff]
      %v59 = vld [vmem:[%s2 + $0x98] sm:$0xff]
      %v60 = vld [vmem:[%s2 + $0xa0] sm:$0xff]
      %v61 = vld [vmem:[%s2 + $0xa8] sm:$0xff]
      %v62 = vld [vmem:[%s2 + $0xb0] sm:$0xff]
      %v63 = vld [vmem:[%s2 + $0xb8] sm:$0xff]
      %v64 = vld [vmem:[%s2 + $0xc0] sm:$0xff]
      %v65 = vld [vmem:[%s2 + $0xc8] sm:$0xff]
      %v66 = vld [vmem:[%s2 + $0xd0] sm:$0xff]
      %v67 = vld [vmem:[%s2 + $0xd8] sm:$0xff]
      %v68 = vld [vmem:[%s2 + $0xe0] sm:$0xff]
      %v69 = vld [vmem:[%s2 + $0xe8] sm:$0xff]
      %v70 = vld [vmem:[%s2 + $0xf0] sm:$0xff]
      %v71 = vld [vmem:[%s2 + $0xf8] sm:$0xff]
      %v72 = vld [vmem:[%s2 + $0x100] sm:$0xff]
      %v73 = vld [vmem:[%s2 + $0x108] sm:$0xff]
      %v74 = vld [vmem:[%s2 + $0x110] sm:$0xff]
      %v75 = vld [vmem:[%s2 + $0x118] sm:$0xff]
      %v76 = vld [vmem:[%s2 + $0x120] sm:$0xff]
      %v77 = vld [vmem:[%s2 + $0x128] sm:$0xff]
      %v78 = vld [vmem:[%s2 + $0x130] sm:$0xff]
      %v79 = vld [vmem:[%s2 + $0x138] sm:$0xff]
      %v80 = vld [vmem:[%s2 + $0x140] sm:$0xff]
      %v81 = vld [vmem:[%s2 + $0x148] sm:$0xff]
      %v82 = vld [vmem:[%s2 + $0x150] sm:$0xff]
      %v83 = vld [vmem:[%s2 + $0x158] sm:$0xff]
      %v84 = vld [vmem:[%s2 + $0x160] sm:$0xff]
      %v85 = vld [vmem:[%s2 + $0x168] sm:$0xff]
      %v86 = vld [vmem:[%s2 + $0x170] sm:$0xff]
      %v87 = vld [vmem:[%s2 + $0x178] sm:$0xff]
      %v88 = vld [vmem:[%s2 + $0x180] sm:$0xff]
      %v89 = vld [vmem:[%s2 + $0x188] sm:$0xff]
      %v90 = vld [vmem:[%s2 + $0x190] sm:$0xff]
      %v91 = vld [vmem:[%s2 + $0x198] sm:$0xff]
      %v92 = vld [vmem:[%s2 + $0x1a0] sm:$0xff]
      %v93 = vld [vmem:[%s2 + $0x1a8] sm:$0xff]
      %v94 = vld [vmem:[%s2 + $0x1b0] sm:$0xff]
      %v95 = vld [vmem:[%s2 + $0x1b8] sm:$0xff]
      %v96 = vld [vmem:[%s2 + $0x1c0] sm:$0xff]
      %v97 = vld [vmem:[%s2 + $0x1c8] sm:$0xff]
      %v98 = vld [vmem:[%s2 + $0x1d0] sm:$0xff]
      %v99 = vld [vmem:[%s2 + $0x1d8] sm:$0xff]
      %v100 = vld [vmem:[%s2 + $0x1e0] sm:$0xff]
      %v101 = vld [vmem:[%s2 + $0x1e8] sm:$0xff]
      %v102 = vld [vmem:[%s2 + $0x1f0] sm:$0xff]
      %v103 = vld [vmem:[%s2 + $0x1f8] sm:$0xff]
      %v104 = vld [vmem:[%s4] sm:$0x1]
      %v105 = vadd.f32 %v38, 0.5
      %v106 = vadd.f32 %v39, 0.5
      %v109 = vlaneseq
      %v110 = vshrl.u32 %v109, 7
      %v111 = vsub.s32 1, %v110
      %v112 = vrot.slane %v36, %v111
      %v113 = vlaneseq
      %v114 = vshrl.u32 %v113, 7
      %v115 = vsub.s32 5, %v114
      %v116 = vrot.slane %v36, %v115
      %v117 = vlaneseq
      %v118 = vshrl.u32 %v117, 7
      %v119 = vsub.s32 1, %v118
      %v120 = vrot.slane %v37, %v119
      %v121 = vlaneseq
      %v122 = vshrl.u32 %v121, 7
      %v123 = vsub.s32 5, %v122
      %v124 = vrot.slane %v37, %v123
      %v129 = vlaneseq
      %v130 = vshrl.u32 %v129, 7
      %v131 = vsub.s32 1, %v130
      %v132 = vrot.slane %v112, %v131
      %v133 = vlaneseq
      %v134 = vshrl.u32 %v133, 7
      %v135 = vsub.s32 1, %v134
      %v136 = vrot.slane %v116, %v135
      %v137 = vlaneseq
      %v138 = vshrl.u32 %v137, 7
      %v139 = vsub.s32 1, %v138
      %v140 = vrot.slane %v120, %v139
      %v141 = vlaneseq
      %v142 = vshrl.u32 %v141, 7
      %v143 = vsub.s32 1, %v142
      %v144 = vrot.slane %v124, %v143
      %146 = vset.pattern.permute.xlu0 0
      %147 = vperm.xlu0 %146, %v105
      %v148 = vpop.permute.xlu0 %147
      %151 = vset.pattern.permute.xlu0 0
      %152 = vperm.xlu0 %151, %v106
      %v153 = vpop.permute.xlu0 %152
      %v155 = vmin.f32 %v132, %v148
      %v156 = vmin.f32 %v136, %v148
      %v157 = vmin.f32 %v140, %v148
      %v158 = vmin.f32 %v144, %v148
      %v159 = vmin.f32 %v132, %v153
      %v160 = vmin.f32 %v136, %v153
      %v161 = vmin.f32 %v140, %v153
      %v162 = vmin.f32 %v144, %v153
      %v163 = vsub.f32 %v38, 0.5
      %v164 = vsub.f32 %v39, 0.5
      %v165 = vlaneseq
      %v166 = vshrl.u32 %v165, 7
      %v167 = vsub.s32 0, %v166
      %v168 = vrot.slane %v36, %v167
      %v169 = vlaneseq
      %v170 = vshrl.u32 %v169, 7
      %v171 = vsub.s32 4, %v170
      %v172 = vrot.slane %v36, %v171
      %v173 = vlaneseq
      %v174 = vshrl.u32 %v173, 7
      %v175 = vsub.s32 0, %v174
      %v176 = vrot.slane %v37, %v175
      %v177 = vlaneseq
      %v178 = vshrl.u32 %v177, 7
      %v179 = vsub.s32 4, %v178
      %v180 = vrot.slane %v37, %v179
      %v185 = vlaneseq
      %v186 = vshrl.u32 %v185, 7
      %v187 = vsub.s32 0, %v186
      %v188 = vrot.slane %v168, %v187
      %v189 = vlaneseq
      %v190 = vshrl.u32 %v189, 7
      %v191 = vsub.s32 0, %v190
      %v192 = vrot.slane %v172, %v191
      %v193 = vlaneseq
      %v194 = vshrl.u32 %v193, 7
      %v195 = vsub.s32 0, %v194
      %v196 = vrot.slane %v176, %v195
      %v197 = vlaneseq
      %v198 = vshrl.u32 %v197, 7
      %v199 = vsub.s32 0, %v198
      %v200 = vrot.slane %v180, %v199
      %202 = vset.pattern.permute.xlu0 0
      %203 = vperm.xlu0 %202, %v163
      %v204 = vpop.permute.xlu0 %203
      %207 = vset.pattern.permute.xlu0 0
      %208 = vperm.xlu0 %207, %v164
      %v209 = vpop.permute.xlu0 %208
      %v211 = vmax.f32 %v188, %v204
      %v212 = vmax.f32 %v192, %v204
      %v213 = vmax.f32 %v196, %v204
      %v214 = vmax.f32 %v200, %v204
      %v215 = vmax.f32 %v188, %v209
      %v216 = vmax.f32 %v192, %v209
      %v217 = vmax.f32 %v196, %v209
      %v218 = vmax.f32 %v200, %v209
      %v219 = vsub.f32 %v155, %v211
      %v220 = vsub.f32 %v156, %v212
      %v221 = vsub.f32 %v157, %v213
      %v222 = vsub.f32 %v158, %v214
      %v223 = vsub.f32 %v159, %v215
      %v224 = vsub.f32 %v160, %v216
      %v225 = vsub.f32 %v161, %v217
      %v226 = vsub.f32 %v162, %v218
      %v227 = vmax.f32 %v219, 0.0
      %v228 = vmax.f32 %v220, 0.0
      %v229 = vmax.f32 %v221, 0.0
      %v230 = vmax.f32 %v222, 0.0
      %v231 = vmax.f32 %v223, 0.0
      %v232 = vmax.f32 %v224, 0.0
      %v233 = vmax.f32 %v225, 0.0
      %v234 = vmax.f32 %v226, 0.0
      %v235 = vlaneseq
      %v236 = vshrl.u32 %v235, 7
      %v237 = vsub.s32 2, %v236
      %v238 = vrot.slane %v36, %v237
      %v239 = vlaneseq
      %v240 = vshrl.u32 %v239, 7
      %v241 = vsub.s32 6, %v240
      %v242 = vrot.slane %v36, %v241
      %v243 = vlaneseq
      %v244 = vshrl.u32 %v243, 7
      %v245 = vsub.s32 2, %v244
      %v246 = vrot.slane %v37, %v245
      %v247 = vlaneseq
      %v248 = vshrl.u32 %v247, 7
      %v249 = vsub.s32 6, %v248
      %v250 = vrot.slane %v37, %v249
      %v255 = vlaneseq
      %v256 = vshrl.u32 %v255, 7
      %v257 = vsub.s32 2, %v256
      %v258 = vrot.slane %v238, %v257
      %v259 = vlaneseq
      %v260 = vshrl.u32 %v259, 7
      %v261 = vsub.s32 2, %v260
      %v262 = vrot.slane %v242, %v261
      %v263 = vlaneseq
      %v264 = vshrl.u32 %v263, 7
      %v265 = vsub.s32 2, %v264
      %v266 = vrot.slane %v246, %v265
      %v267 = vlaneseq
      %v268 = vshrl.u32 %v267, 7
      %v269 = vsub.s32 2, %v268
      %v270 = vrot.slane %v250, %v269
      %v271 = vmul.f32 %v227, %v258
      %v272 = vmul.f32 %v228, %v262
      %v273 = vmul.f32 %v229, %v266
      %v274 = vmul.f32 %v230, %v270
      %v275 = vmul.f32 %v231, %v258
      %v276 = vmul.f32 %v232, %v262
      %v277 = vmul.f32 %v233, %v266
      %v278 = vmul.f32 %v234, %v270
      %v279 = vadd.f32 %v104, 0.5
      %281 = vset.pattern.permute.xlu0 1
      %282 = vperm.xlu0 %281, %v40
      %v283 = vpop.permute.xlu0 %282
      %286 = vset.pattern.permute.xlu0 1
      %287 = vperm.xlu0 %286, %v41
      %v288 = vpop.permute.xlu0 %287
      %291 = vset.pattern.permute.xlu0 1
      %292 = vperm.xlu0 %291, %v42
      %v293 = vpop.permute.xlu0 %292
      %296 = vset.pattern.permute.xlu0 1
      %297 = vperm.xlu0 %296, %v43
      %v298 = vpop.permute.xlu0 %297
      %301 = vset.pattern.permute.xlu0 1
      %302 = vperm.xlu0 %301, %v44
      %v303 = vpop.permute.xlu0 %302
      %306 = vset.pattern.permute.xlu0 1
      %307 = vperm.xlu0 %306, %v45
      %v308 = vpop.permute.xlu0 %307
      %311 = vset.pattern.permute.xlu0 1
      %312 = vperm.xlu0 %311, %v46
      %v313 = vpop.permute.xlu0 %312
      %316 = vset.pattern.permute.xlu0 1
      %317 = vperm.xlu0 %316, %v47
      %v318 = vpop.permute.xlu0 %317
      %321 = vset.pattern.permute.xlu0 1
      %322 = vperm.xlu0 %321, %v48
      %v323 = vpop.permute.xlu0 %322
      %326 = vset.pattern.permute.xlu0 1
      %327 = vperm.xlu0 %326, %v49
      %v328 = vpop.permute.xlu0 %327
      %331 = vset.pattern.permute.xlu0 1
      %332 = vperm.xlu0 %331, %v50
      %v333 = vpop.permute.xlu0 %332
      %336 = vset.pattern.permute.xlu0 1
      %337 = vperm.xlu0 %336, %v51
      %v338 = vpop.permute.xlu0 %337
      %341 = vset.pattern.permute.xlu0 1
      %342 = vperm.xlu0 %341, %v52
      %v343 = vpop.permute.xlu0 %342
      %346 = vset.pattern.permute.xlu0 1
      %347 = vperm.xlu0 %346, %v53
      %v348 = vpop.permute.xlu0 %347
      %351 = vset.pattern.permute.xlu0 1
      %352 = vperm.xlu0 %351, %v54
      %v353 = vpop.permute.xlu0 %352
      %356 = vset.pattern.permute.xlu0 1
      %357 = vperm.xlu0 %356, %v55
      %v358 = vpop.permute.xlu0 %357
      %361 = vset.pattern.permute.xlu0 1
      %362 = vperm.xlu0 %361, %v56
      %v363 = vpop.permute.xlu0 %362
      %366 = vset.pattern.permute.xlu0 1
      %367 = vperm.xlu0 %366, %v57
      %v368 = vpop.permute.xlu0 %367
      %371 = vset.pattern.permute.xlu0 1
      %372 = vperm.xlu0 %371, %v58
      %v373 = vpop.permute.xlu0 %372
      %376 = vset.pattern.permute.xlu0 1
      %377 = vperm.xlu0 %376, %v59
      %v378 = vpop.permute.xlu0 %377
      %381 = vset.pattern.permute.xlu0 1
      %382 = vperm.xlu0 %381, %v60
      %v383 = vpop.permute.xlu0 %382
      %386 = vset.pattern.permute.xlu0 1
      %387 = vperm.xlu0 %386, %v61
      %v388 = vpop.permute.xlu0 %387
      %391 = vset.pattern.permute.xlu0 1
      %392 = vperm.xlu0 %391, %v62
      %v393 = vpop.permute.xlu0 %392
      %396 = vset.pattern.permute.xlu0 1
      %397 = vperm.xlu0 %396, %v63
      %v398 = vpop.permute.xlu0 %397
      %401 = vset.pattern.permute.xlu0 1
      %402 = vperm.xlu0 %401, %v64
      %v403 = vpop.permute.xlu0 %402
      %406 = vset.pattern.permute.xlu0 1
      %407 = vperm.xlu0 %406, %v65
      %v408 = vpop.permute.xlu0 %407
      %411 = vset.pattern.permute.xlu0 1
      %412 = vperm.xlu0 %411, %v66
      %v413 = vpop.permute.xlu0 %412
      %416 = vset.pattern.permute.xlu0 1
      %417 = vperm.xlu0 %416, %v67
      %v418 = vpop.permute.xlu0 %417
      %421 = vset.pattern.permute.xlu0 1
      %422 = vperm.xlu0 %421, %v68
      %v423 = vpop.permute.xlu0 %422
      %426 = vset.pattern.permute.xlu0 1
      %427 = vperm.xlu0 %426, %v69
      %v428 = vpop.permute.xlu0 %427
      %431 = vset.pattern.permute.xlu0 1
      %432 = vperm.xlu0 %431, %v70
      %v433 = vpop.permute.xlu0 %432
      %436 = vset.pattern.permute.xlu0 1
      %437 = vperm.xlu0 %436, %v71
      %v438 = vpop.permute.xlu0 %437
      %441 = vset.pattern.permute.xlu0 1
      %442 = vperm.xlu0 %441, %v72
      %v443 = vpop.permute.xlu0 %442
      %446 = vset.pattern.permute.xlu0 1
      %447 = vperm.xlu0 %446, %v73
      %v448 = vpop.permute.xlu0 %447
      %451 = vset.pattern.permute.xlu0 1
      %452 = vperm.xlu0 %451, %v74
      %v453 = vpop.permute.xlu0 %452
      %456 = vset.pattern.permute.xlu0 1
      %457 = vperm.xlu0 %456, %v75
      %v458 = vpop.permute.xlu0 %457
      %461 = vset.pattern.permute.xlu0 1
      %462 = vperm.xlu0 %461, %v76
      %v463 = vpop.permute.xlu0 %462
      %466 = vset.pattern.permute.xlu0 1
      %467 = vperm.xlu0 %466, %v77
      %v468 = vpop.permute.xlu0 %467
      %471 = vset.pattern.permute.xlu0 1
      %472 = vperm.xlu0 %471, %v78
      %v473 = vpop.permute.xlu0 %472
      %476 = vset.pattern.permute.xlu0 1
      %477 = vperm.xlu0 %476, %v79
      %v478 = vpop.permute.xlu0 %477
      %481 = vset.pattern.permute.xlu0 1
      %482 = vperm.xlu0 %481, %v80
      %v483 = vpop.permute.xlu0 %482
      %486 = vset.pattern.permute.xlu0 1
      %487 = vperm.xlu0 %486, %v81
      %v488 = vpop.permute.xlu0 %487
      %491 = vset.pattern.permute.xlu0 1
      %492 = vperm.xlu0 %491, %v82
      %v493 = vpop.permute.xlu0 %492
      %496 = vset.pattern.permute.xlu0 1
      %497 = vperm.xlu0 %496, %v83
      %v498 = vpop.permute.xlu0 %497
      %501 = vset.pattern.permute.xlu0 1
      %502 = vperm.xlu0 %501, %v84
      %v503 = vpop.permute.xlu0 %502
      %506 = vset.pattern.permute.xlu0 1
      %507 = vperm.xlu0 %506, %v85
      %v508 = vpop.permute.xlu0 %507
      %511 = vset.pattern.permute.xlu0 1
      %512 = vperm.xlu0 %511, %v86
      %v513 = vpop.permute.xlu0 %512
      %516 = vset.pattern.permute.xlu0 1
      %517 = vperm.xlu0 %516, %v87
      %v518 = vpop.permute.xlu0 %517
      %521 = vset.pattern.permute.xlu0 1
      %522 = vperm.xlu0 %521, %v88
      %v523 = vpop.permute.xlu0 %522
      %526 = vset.pattern.permute.xlu0 1
      %527 = vperm.xlu0 %526, %v89
      %v528 = vpop.permute.xlu0 %527
      %531 = vset.pattern.permute.xlu0 1
      %532 = vperm.xlu0 %531, %v90
      %v533 = vpop.permute.xlu0 %532
      %536 = vset.pattern.permute.xlu0 1
      %537 = vperm.xlu0 %536, %v91
      %v538 = vpop.permute.xlu0 %537
      %541 = vset.pattern.permute.xlu0 1
      %542 = vperm.xlu0 %541, %v92
      %v543 = vpop.permute.xlu0 %542
      %546 = vset.pattern.permute.xlu0 1
      %547 = vperm.xlu0 %546, %v93
      %v548 = vpop.permute.xlu0 %547
      %551 = vset.pattern.permute.xlu0 1
      %552 = vperm.xlu0 %551, %v94
      %v553 = vpop.permute.xlu0 %552
      %556 = vset.pattern.permute.xlu0 1
      %557 = vperm.xlu0 %556, %v95
      %v558 = vpop.permute.xlu0 %557
      %561 = vset.pattern.permute.xlu0 1
      %562 = vperm.xlu0 %561, %v96
      %v563 = vpop.permute.xlu0 %562
      %566 = vset.pattern.permute.xlu0 1
      %567 = vperm.xlu0 %566, %v97
      %v568 = vpop.permute.xlu0 %567
      %571 = vset.pattern.permute.xlu0 1
      %572 = vperm.xlu0 %571, %v98
      %v573 = vpop.permute.xlu0 %572
      %576 = vset.pattern.permute.xlu0 1
      %577 = vperm.xlu0 %576, %v99
      %v578 = vpop.permute.xlu0 %577
      %581 = vset.pattern.permute.xlu0 1
      %582 = vperm.xlu0 %581, %v100
      %v583 = vpop.permute.xlu0 %582
      %586 = vset.pattern.permute.xlu0 1
      %587 = vperm.xlu0 %586, %v101
      %v588 = vpop.permute.xlu0 %587
      %591 = vset.pattern.permute.xlu0 1
      %592 = vperm.xlu0 %591, %v102
      %v593 = vpop.permute.xlu0 %592
      %596 = vset.pattern.permute.xlu0 1
      %597 = vperm.xlu0 %596, %v103
      %v598 = vpop.permute.xlu0 %597
      %v601 = vlaneseq
      %v602 = vshrl.u32 %v601, 7
      %v603 = vsub.s32 0, %v602
      %v604 = vrot.slane %v279, %v603
      %v606 = vmin.f32 %v283, %v604
      %v607 = vmin.f32 %v288, %v604
      %v608 = vmin.f32 %v293, %v604
      %v609 = vmin.f32 %v298, %v604
      %v610 = vmin.f32 %v303, %v604
      %v611 = vmin.f32 %v308, %v604
      %v612 = vmin.f32 %v313, %v604
      %v613 = vmin.f32 %v318, %v604
      %v614 = vmin.f32 %v323, %v604
      %v615 = vmin.f32 %v328, %v604
      %v616 = vmin.f32 %v333, %v604
      %v617 = vmin.f32 %v338, %v604
      %v618 = vmin.f32 %v343, %v604
      %v619 = vmin.f32 %v348, %v604
      %v620 = vmin.f32 %v353, %v604
      %v621 = vmin.f32 %v358, %v604
      %v622 = vmin.f32 %v363, %v604
      %v623 = vmin.f32 %v368, %v604
      %v624 = vmin.f32 %v373, %v604
      %v625 = vmin.f32 %v378, %v604
      %v626 = vmin.f32 %v383, %v604
      %v627 = vmin.f32 %v388, %v604
      %v628 = vmin.f32 %v393, %v604
      %v629 = vmin.f32 %v398, %v604
      %v630 = vmin.f32 %v403, %v604
      %v631 = vmin.f32 %v408, %v604
      %v632 = vmin.f32 %v413, %v604
      %v633 = vmin.f32 %v418, %v604
      %v634 = vmin.f32 %v423, %v604
      %v635 = vmin.f32 %v428, %v604
      %v636 = vmin.f32 %v433, %v604
      %v637 = vmin.f32 %v438, %v604
      %v638 = vmin.f32 %v443, %v604
      %v639 = vmin.f32 %v448, %v604
      %v640 = vmin.f32 %v453, %v604
      %v641 = vmin.f32 %v458, %v604
      %v642 = vmin.f32 %v463, %v604
      %v643 = vmin.f32 %v468, %v604
      %v644 = vmin.f32 %v473, %v604
      %v645 = vmin.f32 %v478, %v604
      %v646 = vmin.f32 %v483, %v604
      %v647 = vmin.f32 %v488, %v604
      %v648 = vmin.f32 %v493, %v604
      %v649 = vmin.f32 %v498, %v604
      %v650 = vmin.f32 %v503, %v604
      %v651 = vmin.f32 %v508, %v604
      %v652 = vmin.f32 %v513, %v604
      %v653 = vmin.f32 %v518, %v604
      %v654 = vmin.f32 %v523, %v604
      %v655 = vmin.f32 %v528, %v604
      %v656 = vmin.f32 %v533, %v604
      %v657 = vmin.f32 %v538, %v604
      %v658 = vmin.f32 %v543, %v604
      %v659 = vmin.f32 %v548, %v604
      %v660 = vmin.f32 %v553, %v604
      %v661 = vmin.f32 %v558, %v604
      %v662 = vmin.f32 %v563, %v604
      %v663 = vmin.f32 %v568, %v604
      %v664 = vmin.f32 %v573, %v604
      %v665 = vmin.f32 %v578, %v604
      %v666 = vmin.f32 %v583, %v604
      %v667 = vmin.f32 %v588, %v604
      %v668 = vmin.f32 %v593, %v604
      %v669 = vmin.f32 %v598, %v604
      %v670 = vsub.f32 %v104, 0.5
      %671 = vset.pattern.permute.xlu0 0
      %672 = vperm.xlu0 %671, %v40
      %v673 = vpop.permute.xlu0 %672
      %675 = vset.pattern.permute.xlu0 0
      %676 = vperm.xlu0 %675, %v41
      %v677 = vpop.permute.xlu0 %676
      %679 = vset.pattern.permute.xlu0 0
      %680 = vperm.xlu0 %679, %v42
      %v681 = vpop.permute.xlu0 %680
      %683 = vset.pattern.permute.xlu0 0
      %684 = vperm.xlu0 %683, %v43
      %v685 = vpop.permute.xlu0 %684
      %687 = vset.pattern.permute.xlu0 0
      %688 = vperm.xlu0 %687, %v44
      %v689 = vpop.permute.xlu0 %688
      %691 = vset.pattern.permute.xlu0 0
      %692 = vperm.xlu0 %691, %v45
      %v693 = vpop.permute.xlu0 %692
      %695 = vset.pattern.permute.xlu0 0
      %696 = vperm.xlu0 %695, %v46
      %v697 = vpop.permute.xlu0 %696
      %699 = vset.pattern.permute.xlu0 0
      %700 = vperm.xlu0 %699, %v47
      %v701 = vpop.permute.xlu0 %700
      %703 = vset.pattern.permute.xlu0 0
      %704 = vperm.xlu0 %703, %v48
      %v705 = vpop.permute.xlu0 %704
      %707 = vset.pattern.permute.xlu0 0
      %708 = vperm.xlu0 %707, %v49
      %v709 = vpop.permute.xlu0 %708
      %711 = vset.pattern.permute.xlu0 0
      %712 = vperm.xlu0 %711, %v50
      %v713 = vpop.permute.xlu0 %712
      %715 = vset.pattern.permute.xlu0 0
      %716 = vperm.xlu0 %715, %v51
      %v717 = vpop.permute.xlu0 %716
      %719 = vset.pattern.permute.xlu0 0
      %720 = vperm.xlu0 %719, %v52
      %v721 = vpop.permute.xlu0 %720
      %723 = vset.pattern.permute.xlu0 0
      %724 = vperm.xlu0 %723, %v53
      %v725 = vpop.permute.xlu0 %724
      %727 = vset.pattern.permute.xlu0 0
      %728 = vperm.xlu0 %727, %v54
      %v729 = vpop.permute.xlu0 %728
      %731 = vset.pattern.permute.xlu0 0
      %732 = vperm.xlu0 %731, %v55
      %v733 = vpop.permute.xlu0 %732
      %735 = vset.pattern.permute.xlu0 0
      %736 = vperm.xlu0 %735, %v56
      %v737 = vpop.permute.xlu0 %736
      %739 = vset.pattern.permute.xlu0 0
      %740 = vperm.xlu0 %739, %v57
      %v741 = vpop.permute.xlu0 %740
      %743 = vset.pattern.permute.xlu0 0
      %744 = vperm.xlu0 %743, %v58
      %v745 = vpop.permute.xlu0 %744
      %747 = vset.pattern.permute.xlu0 0
      %748 = vperm.xlu0 %747, %v59
      %v749 = vpop.permute.xlu0 %748
      %751 = vset.pattern.permute.xlu0 0
      %752 = vperm.xlu0 %751, %v60
      %v753 = vpop.permute.xlu0 %752
      %755 = vset.pattern.permute.xlu0 0
      %756 = vperm.xlu0 %755, %v61
      %v757 = vpop.permute.xlu0 %756
      %759 = vset.pattern.permute.xlu0 0
      %760 = vperm.xlu0 %759, %v62
      %v761 = vpop.permute.xlu0 %760
      %763 = vset.pattern.permute.xlu0 0
      %764 = vperm.xlu0 %763, %v63
      %v765 = vpop.permute.xlu0 %764
      %767 = vset.pattern.permute.xlu0 0
      %768 = vperm.xlu0 %767, %v64
      %v769 = vpop.permute.xlu0 %768
      %771 = vset.pattern.permute.xlu0 0
      %772 = vperm.xlu0 %771, %v65
      %v773 = vpop.permute.xlu0 %772
      %775 = vset.pattern.permute.xlu0 0
      %776 = vperm.xlu0 %775, %v66
      %v777 = vpop.permute.xlu0 %776
      %779 = vset.pattern.permute.xlu0 0
      %780 = vperm.xlu0 %779, %v67
      %v781 = vpop.permute.xlu0 %780
      %783 = vset.pattern.permute.xlu0 0
      %784 = vperm.xlu0 %783, %v68
      %v785 = vpop.permute.xlu0 %784
      %787 = vset.pattern.permute.xlu0 0
      %788 = vperm.xlu0 %787, %v69
      %v789 = vpop.permute.xlu0 %788
      %791 = vset.pattern.permute.xlu0 0
      %792 = vperm.xlu0 %791, %v70
      %v793 = vpop.permute.xlu0 %792
      %795 = vset.pattern.permute.xlu0 0
      %796 = vperm.xlu0 %795, %v71
      %v797 = vpop.permute.xlu0 %796
      %799 = vset.pattern.permute.xlu0 0
      %800 = vperm.xlu0 %799, %v72
      %v801 = vpop.permute.xlu0 %800
      %803 = vset.pattern.permute.xlu0 0
      %804 = vperm.xlu0 %803, %v73
      %v805 = vpop.permute.xlu0 %804
      %807 = vset.pattern.permute.xlu0 0
      %808 = vperm.xlu0 %807, %v74
      %v809 = vpop.permute.xlu0 %808
      %811 = vset.pattern.permute.xlu0 0
      %812 = vperm.xlu0 %811, %v75
      %v813 = vpop.permute.xlu0 %812
      %815 = vset.pattern.permute.xlu0 0
      %816 = vperm.xlu0 %815, %v76
      %v817 = vpop.permute.xlu0 %816
      %819 = vset.pattern.permute.xlu0 0
      %820 = vperm.xlu0 %819, %v77
      %v821 = vpop.permute.xlu0 %820
      %823 = vset.pattern.permute.xlu0 0
      %824 = vperm.xlu0 %823, %v78
      %v825 = vpop.permute.xlu0 %824
      %827 = vset.pattern.permute.xlu0 0
      %828 = vperm.xlu0 %827, %v79
      %v829 = vpop.permute.xlu0 %828
      %831 = vset.pattern.permute.xlu0 0
      %832 = vperm.xlu0 %831, %v80
      %v833 = vpop.permute.xlu0 %832
      %835 = vset.pattern.permute.xlu0 0
      %836 = vperm.xlu0 %835, %v81
      %v837 = vpop.permute.xlu0 %836
      %839 = vset.pattern.permute.xlu0 0
      %840 = vperm.xlu0 %839, %v82
      %v841 = vpop.permute.xlu0 %840
      %843 = vset.pattern.permute.xlu0 0
      %844 = vperm.xlu0 %843, %v83
      %v845 = vpop.permute.xlu0 %844
      %847 = vset.pattern.permute.xlu0 0
      %848 = vperm.xlu0 %847, %v84
      %v849 = vpop.permute.xlu0 %848
      %851 = vset.pattern.permute.xlu0 0
      %852 = vperm.xlu0 %851, %v85
      %v853 = vpop.permute.xlu0 %852
      %855 = vset.pattern.permute.xlu0 0
      %856 = vperm.xlu0 %855, %v86
      %v857 = vpop.permute.xlu0 %856
      %859 = vset.pattern.permute.xlu0 0
      %860 = vperm.xlu0 %859, %v87
      %v861 = vpop.permute.xlu0 %860
      %863 = vset.pattern.permute.xlu0 0
      %864 = vperm.xlu0 %863, %v88
      %v865 = vpop.permute.xlu0 %864
      %867 = vset.pattern.permute.xlu0 0
      %868 = vperm.xlu0 %867, %v89
      %v869 = vpop.permute.xlu0 %868
      %871 = vset.pattern.permute.xlu0 0
      %872 = vperm.xlu0 %871, %v90
      %v873 = vpop.permute.xlu0 %872
      %875 = vset.pattern.permute.xlu0 0
      %876 = vperm.xlu0 %875, %v91
      %v877 = vpop.permute.xlu0 %876
      %879 = vset.pattern.permute.xlu0 0
      %880 = vperm.xlu0 %879, %v92
      %v881 = vpop.permute.xlu0 %880
      %883 = vset.pattern.permute.xlu0 0
      %884 = vperm.xlu0 %883, %v93
      %v885 = vpop.permute.xlu0 %884
      %887 = vset.pattern.permute.xlu0 0
      %888 = vperm.xlu0 %887, %v94
      %v889 = vpop.permute.xlu0 %888
      %891 = vset.pattern.permute.xlu0 0
      %892 = vperm.xlu0 %891, %v95
      %v893 = vpop.permute.xlu0 %892
      %895 = vset.pattern.permute.xlu0 0
      %896 = vperm.xlu0 %895, %v96
      %v897 = vpop.permute.xlu0 %896
      %899 = vset.pattern.permute.xlu0 0
      %900 = vperm.xlu0 %899, %v97
      %v901 = vpop.permute.xlu0 %900
      %903 = vset.pattern.permute.xlu0 0
      %904 = vperm.xlu0 %903, %v98
      %v905 = vpop.permute.xlu0 %904
      %907 = vset.pattern.permute.xlu0 0
      %908 = vperm.xlu0 %907, %v99
      %v909 = vpop.permute.xlu0 %908
      %911 = vset.pattern.permute.xlu0 0
      %912 = vperm.xlu0 %911, %v100
      %v913 = vpop.permute.xlu0 %912
      %915 = vset.pattern.permute.xlu0 0
      %916 = vperm.xlu0 %915, %v101
      %v917 = vpop.permute.xlu0 %916
      %919 = vset.pattern.permute.xlu0 0
      %920 = vperm.xlu0 %919, %v102
      %v921 = vpop.permute.xlu0 %920
      %923 = vset.pattern.permute.xlu0 0
      %924 = vperm.xlu0 %923, %v103
      %v925 = vpop.permute.xlu0 %924
      %v928 = vlaneseq
      %v929 = vshrl.u32 %v928, 7
      %v930 = vsub.s32 0, %v929
      %v931 = vrot.slane %v670, %v930
      %v933 = vmax.f32 %v673, %v931
      %v934 = vmax.f32 %v677, %v931
      %v935 = vmax.f32 %v681, %v931
      %v936 = vmax.f32 %v685, %v931
      %v937 = vmax.f32 %v689, %v931
      %v938 = vmax.f32 %v693, %v931
      %v939 = vmax.f32 %v697, %v931
      %v940 = vmax.f32 %v701, %v931
      %v941 = vmax.f32 %v705, %v931
      %v942 = vmax.f32 %v709, %v931
      %v943 = vmax.f32 %v713, %v931
      %v944 = vmax.f32 %v717, %v931
      %v945 = vmax.f32 %v721, %v931
      %v946 = vmax.f32 %v725, %v931
      %v947 = vmax.f32 %v729, %v931
      %v948 = vmax.f32 %v733, %v931
      %v949 = vmax.f32 %v737, %v931
      %v950 = vmax.f32 %v741, %v931
      %v951 = vmax.f32 %v745, %v931
      %v952 = vmax.f32 %v749, %v931
      %v953 = vmax.f32 %v753, %v931
      %v954 = vmax.f32 %v757, %v931
      %v955 = vmax.f32 %v761, %v931
      %v956 = vmax.f32 %v765, %v931
      %v957 = vmax.f32 %v769, %v931
      %v958 = vmax.f32 %v773, %v931
      %v959 = vmax.f32 %v777, %v931
      %v960 = vmax.f32 %v781, %v931
      %v961 = vmax.f32 %v785, %v931
      %v962 = vmax.f32 %v789, %v931
      %v963 = vmax.f32 %v793, %v931
      %v964 = vmax.f32 %v797, %v931
      %v965 = vmax.f32 %v801, %v931
      %v966 = vmax.f32 %v805, %v931
      %v967 = vmax.f32 %v809, %v931
      %v968 = vmax.f32 %v813, %v931
      %v969 = vmax.f32 %v817, %v931
      %v970 = vmax.f32 %v821, %v931
      %v971 = vmax.f32 %v825, %v931
      %v972 = vmax.f32 %v829, %v931
      %v973 = vmax.f32 %v833, %v931
      %v974 = vmax.f32 %v837, %v931
      %v975 = vmax.f32 %v841, %v931
      %v976 = vmax.f32 %v845, %v931
      %v977 = vmax.f32 %v849, %v931
      %v978 = vmax.f32 %v853, %v931
      %v979 = vmax.f32 %v857, %v931
      %v980 = vmax.f32 %v861, %v931
      %v981 = vmax.f32 %v865, %v931
      %v982 = vmax.f32 %v869, %v931
      %v983 = vmax.f32 %v873, %v931
      %v984 = vmax.f32 %v877, %v931
      %v985 = vmax.f32 %v881, %v931
      %v986 = vmax.f32 %v885, %v931
      %v987 = vmax.f32 %v889, %v931
      %v988 = vmax.f32 %v893, %v931
      %v989 = vmax.f32 %v897, %v931
      %v990 = vmax.f32 %v901, %v931
      %v991 = vmax.f32 %v905, %v931
      %v992 = vmax.f32 %v909, %v931
      %v993 = vmax.f32 %v913, %v931
      %v994 = vmax.f32 %v917, %v931
      %v995 = vmax.f32 %v921, %v931
      %v996 = vmax.f32 %v925, %v931
      %v997 = vsub.f32 %v606, %v933
      %v998 = vsub.f32 %v607, %v934
      %v999 = vsub.f32 %v608, %v935
      %v1000 = vsub.f32 %v609, %v936
      %v1001 = vsub.f32 %v610, %v937
      %v1002 = vsub.f32 %v611, %v938
      %v1003 = vsub.f32 %v612, %v939
      %v1004 = vsub.f32 %v613, %v940
      %v1005 = vsub.f32 %v614, %v941
      %v1006 = vsub.f32 %v615, %v942
      %v1007 = vsub.f32 %v616, %v943
      %v1008 = vsub.f32 %v617, %v944
      %v1009 = vsub.f32 %v618, %v945
      %v1010 = vsub.f32 %v619, %v946
      %v1011 = vsub.f32 %v620, %v947
      %v1012 = vsub.f32 %v621, %v948
      %v1013 = vsub.f32 %v622, %v949
      %v1014 = vsub.f32 %v623, %v950
      %v1015 = vsub.f32 %v624, %v951
      %v1016 = vsub.f32 %v625, %v952
      %v1017 = vsub.f32 %v626, %v953
      %v1018 = vsub.f32 %v627, %v954
      %v1019 = vsub.f32 %v628, %v955
      %v1020 = vsub.f32 %v629, %v956
      %v1021 = vsub.f32 %v630, %v957
      %v1022 = vsub.f32 %v631, %v958
      %v1023 = vsub.f32 %v632, %v959
      %v1024 = vsub.f32 %v633, %v960
      %v1025 = vsub.f32 %v634, %v961
      %v1026 = vsub.f32 %v635, %v962
      %v1027 = vsub.f32 %v636, %v963
      %v1028 = vsub.f32 %v637, %v964
      %v1029 = vsub.f32 %v638, %v965
      %v1030 = vsub.f32 %v639, %v966
      %v1031 = vsub.f32 %v640, %v967
      %v1032 = vsub.f32 %v641, %v968
      %v1033 = vsub.f32 %v642, %v969
      %v1034 = vsub.f32 %v643, %v970
      %v1035 = vsub.f32 %v644, %v971
      %v1036 = vsub.f32 %v645, %v972
      %v1037 = vsub.f32 %v646, %v973
      %v1038 = vsub.f32 %v647, %v974
      %v1039 = vsub.f32 %v648, %v975
      %v1040 = vsub.f32 %v649, %v976
      %v1041 = vsub.f32 %v650, %v977
      %v1042 = vsub.f32 %v651, %v978
      %v1043 = vsub.f32 %v652, %v979
      %v1044 = vsub.f32 %v653, %v980
      %v1045 = vsub.f32 %v654, %v981
      %v1046 = vsub.f32 %v655, %v982
      %v1047 = vsub.f32 %v656, %v983
      %v1048 = vsub.f32 %v657, %v984
      %v1049 = vsub.f32 %v658, %v985
      %v1050 = vsub.f32 %v659, %v986
      %v1051 = vsub.f32 %v660, %v987
      %v1052 = vsub.f32 %v661, %v988
      %v1053 = vsub.f32 %v662, %v989
      %v1054 = vsub.f32 %v663, %v990
      %v1055 = vsub.f32 %v664, %v991
      %v1056 = vsub.f32 %v665, %v992
      %v1057 = vsub.f32 %v666, %v993
      %v1058 = vsub.f32 %v667, %v994
      %v1059 = vsub.f32 %v668, %v995
      %v1060 = vsub.f32 %v669, %v996
      %v1061 = vmax.f32 %v997, 0.0
      %v1062 = vmax.f32 %v998, 0.0
      %v1063 = vmax.f32 %v999, 0.0
      %v1064 = vmax.f32 %v1000, 0.0
      %v1065 = vmax.f32 %v1001, 0.0
      %v1066 = vmax.f32 %v1002, 0.0
      %v1067 = vmax.f32 %v1003, 0.0
      %v1068 = vmax.f32 %v1004, 0.0
      %v1069 = vmax.f32 %v1005, 0.0
      %v1070 = vmax.f32 %v1006, 0.0
      %v1071 = vmax.f32 %v1007, 0.0
      %v1072 = vmax.f32 %v1008, 0.0
      %v1073 = vmax.f32 %v1009, 0.0
      %v1074 = vmax.f32 %v1010, 0.0
      %v1075 = vmax.f32 %v1011, 0.0
      %v1076 = vmax.f32 %v1012, 0.0
      %v1077 = vmax.f32 %v1013, 0.0
      %v1078 = vmax.f32 %v1014, 0.0
      %v1079 = vmax.f32 %v1015, 0.0
      %v1080 = vmax.f32 %v1016, 0.0
      %v1081 = vmax.f32 %v1017, 0.0
      %v1082 = vmax.f32 %v1018, 0.0
      %v1083 = vmax.f32 %v1019, 0.0
      %v1084 = vmax.f32 %v1020, 0.0
      %v1085 = vmax.f32 %v1021, 0.0
      %v1086 = vmax.f32 %v1022, 0.0
      %v1087 = vmax.f32 %v1023, 0.0
      %v1088 = vmax.f32 %v1024, 0.0
      %v1089 = vmax.f32 %v1025, 0.0
      %v1090 = vmax.f32 %v1026, 0.0
      %v1091 = vmax.f32 %v1027, 0.0
      %v1092 = vmax.f32 %v1028, 0.0
      %v1093 = vmax.f32 %v1029, 0.0
      %v1094 = vmax.f32 %v1030, 0.0
      %v1095 = vmax.f32 %v1031, 0.0
      %v1096 = vmax.f32 %v1032, 0.0
      %v1097 = vmax.f32 %v1033, 0.0
      %v1098 = vmax.f32 %v1034, 0.0
      %v1099 = vmax.f32 %v1035, 0.0
      %v1100 = vmax.f32 %v1036, 0.0
      %v1101 = vmax.f32 %v1037, 0.0
      %v1102 = vmax.f32 %v1038, 0.0
      %v1103 = vmax.f32 %v1039, 0.0
      %v1104 = vmax.f32 %v1040, 0.0
      %v1105 = vmax.f32 %v1041, 0.0
      %v1106 = vmax.f32 %v1042, 0.0
      %v1107 = vmax.f32 %v1043, 0.0
      %v1108 = vmax.f32 %v1044, 0.0
      %v1109 = vmax.f32 %v1045, 0.0
      %v1110 = vmax.f32 %v1046, 0.0
      %v1111 = vmax.f32 %v1047, 0.0
      %v1112 = vmax.f32 %v1048, 0.0
      %v1113 = vmax.f32 %v1049, 0.0
      %v1114 = vmax.f32 %v1050, 0.0
      %v1115 = vmax.f32 %v1051, 0.0
      %v1116 = vmax.f32 %v1052, 0.0
      %v1117 = vmax.f32 %v1053, 0.0
      %v1118 = vmax.f32 %v1054, 0.0
      %v1119 = vmax.f32 %v1055, 0.0
      %v1120 = vmax.f32 %v1056, 0.0
      %v1121 = vmax.f32 %v1057, 0.0
      %v1122 = vmax.f32 %v1058, 0.0
      %v1123 = vmax.f32 %v1059, 0.0
      %v1124 = vmax.f32 %v1060, 0.0
      %1125 = vmatprep.subr.mxu0 0.0
      %1126 = vmatpush1.msra.mxu0 %v1076
      %1127 = vmatprep.subr.mxu0 0.0
      %1128 = vmatpush1.msra.mxu0 %v1075
      %1129 = vmatprep.subr.mxu0 0.0
      %1130 = vmatpush1.msra.mxu0 %v1074
      %1131 = vmatprep.subr.mxu0 0.0
      %1132 = vmatpush1.msra.mxu0 %v1073
      %1133 = vmatprep.subr.mxu0 0.0
      %1134 = vmatpush1.msra.mxu0 %v1072
      %1135 = vmatprep.subr.mxu0 0.0
      %1136 = vmatpush1.msra.mxu0 %v1071
      %1137 = vmatprep.subr.mxu0 0.0
      %1138 = vmatpush1.msra.mxu0 %v1070
      %1139 = vmatprep.subr.mxu0 0.0
      %1140 = vmatpush1.msra.mxu0 %v1069
      %1141 = vmatprep.subr.mxu0 0.0
      %1142 = vmatpush1.msra.mxu0 %v1068
      %1143 = vmatprep.subr.mxu0 0.0
      %1144 = vmatpush1.msra.mxu0 %v1067
      %1145 = vmatprep.subr.mxu0 0.0
      %1146 = vmatpush1.msra.mxu0 %v1066
      %1147 = vmatprep.subr.mxu0 0.0
      %1148 = vmatpush1.msra.mxu0 %v1065
      %1149 = vmatprep.subr.mxu0 0.0
      %1150 = vmatpush1.msra.mxu0 %v1064
      %1151 = vmatprep.subr.mxu0 0.0
      %1152 = vmatpush1.msra.mxu0 %v1063
      %1153 = vmatprep.subr.mxu0 0.0
      %1154 = vmatpush1.msra.mxu0 %v1062
      %1155 = vmatprep.subr.mxu0 0.0
      %1156 = vmatpush1.msra.mxu0 %v1061
      %1157 = vmatprep.subr.mxu0 0.0
      %1158 = vmatpush2.msra.mxu0 %v1092
      %1159 = vmatprep.subr.mxu0 0.0
      %1160 = vmatpush2.msra.mxu0 %v1091
      %1161 = vmatprep.subr.mxu0 0.0
      %1162 = vmatpush2.msra.mxu0 %v1090
      %1163 = vmatprep.subr.mxu0 0.0
      %1164 = vmatpush2.msra.mxu0 %v1089
      %1165 = vmatprep.subr.mxu0 0.0
      %1166 = vmatpush2.msra.mxu0 %v1088
      %1167 = vmatprep.subr.mxu0 0.0
      %1168 = vmatpush2.msra.mxu0 %v1087
      %1169 = vmatprep.subr.mxu0 0.0
      %1170 = vmatpush2.msra.mxu0 %v1086
      %1171 = vmatprep.subr.mxu0 0.0
      %1172 = vmatpush2.msra.mxu0 %v1085
      %1173 = vmatprep.subr.mxu0 0.0
      %1174 = vmatpush2.msra.mxu0 %v1084
      %1175 = vmatprep.subr.mxu0 0.0
      %1176 = vmatpush2.msra.mxu0 %v1083
      %1177 = vmatprep.subr.mxu0 0.0
      %1178 = vmatpush2.msra.mxu0 %v1082
      %1179 = vmatprep.subr.mxu0 0.0
      %1180 = vmatpush2.msra.mxu0 %v1081
      %1181 = vmatprep.subr.mxu0 0.0
      %1182 = vmatpush2.msra.mxu0 %v1080
      %1183 = vmatprep.subr.mxu0 0.0
      %1184 = vmatpush2.msra.mxu0 %v1079
      %1185 = vmatprep.subr.mxu0 0.0
      %1186 = vmatpush2.msra.mxu0 %v1078
      %1187 = vmatprep.subr.mxu0 0.0
      %1188 = vmatpush2.msra.mxu0 %v1077
      %1189 = vmatprep.mubr.f32.mxu0 %v272
      %1190 = vmatmul.mubr.f32.gmra.mxu0 %v271
      %v1191 = vpop.f32.mrf.mxu0
      %v1192 = vadd.f32 0.0, %v1191
      %v1193 = vpop.f32.mrf.mxu0
      %1194 = vmatprep.mubr.f32.mxu0 %v276
      %1195 = vmatmul.mubr.f32.gmra.mxu0 %v275
      %v1196 = vpop.f32.mrf.mxu0
      %v1197 = vadd.f32 0.0, %v1196
      %v1198 = vpop.f32.mrf.mxu0
      %1199 = vdwg.mxu0
      %1200 = vmatprep.subr.mxu0 0.0
      %1201 = vmatpush1.msra.mxu0 %v1108
      %1202 = vmatprep.subr.mxu0 0.0
      %1203 = vmatpush1.msra.mxu0 %v1107
      %1204 = vmatprep.subr.mxu0 0.0
      %1205 = vmatpush1.msra.mxu0 %v1106
      %1206 = vmatprep.subr.mxu0 0.0
      %1207 = vmatpush1.msra.mxu0 %v1105
      %1208 = vmatprep.subr.mxu0 0.0
      %1209 = vmatpush1.msra.mxu0 %v1104
      %1210 = vmatprep.subr.mxu0 0.0
      %1211 = vmatpush1.msra.mxu0 %v1103
      %1212 = vmatprep.subr.mxu0 0.0
      %1213 = vmatpush1.msra.mxu0 %v1102
      %1214 = vmatprep.subr.mxu0 0.0
      %1215 = vmatpush1.msra.mxu0 %v1101
      %1216 = vmatprep.subr.mxu0 0.0
      %1217 = vmatpush1.msra.mxu0 %v1100
      %1218 = vmatprep.subr.mxu0 0.0
      %1219 = vmatpush1.msra.mxu0 %v1099
      %1220 = vmatprep.subr.mxu0 0.0
      %1221 = vmatpush1.msra.mxu0 %v1098
      %1222 = vmatprep.subr.mxu0 0.0
      %1223 = vmatpush1.msra.mxu0 %v1097
      %1224 = vmatprep.subr.mxu0 0.0
      %1225 = vmatpush1.msra.mxu0 %v1096
      %1226 = vmatprep.subr.mxu0 0.0
      %1227 = vmatpush1.msra.mxu0 %v1095
      %1228 = vmatprep.subr.mxu0 0.0
      %1229 = vmatpush1.msra.mxu0 %v1094
      %1230 = vmatprep.subr.mxu0 0.0
      %1231 = vmatpush1.msra.mxu0 %v1093
      %1232 = vmatprep.subr.mxu0 0.0
      %1233 = vmatpush2.msra.mxu0 %v1124
      %1234 = vmatprep.subr.mxu0 0.0
      %1235 = vmatpush2.msra.mxu0 %v1123
      %1236 = vmatprep.subr.mxu0 0.0
      %1237 = vmatpush2.msra.mxu0 %v1122
      %1238 = vmatprep.subr.mxu0 0.0
      %1239 = vmatpush2.msra.mxu0 %v1121
      %1240 = vmatprep.subr.mxu0 0.0
      %1241 = vmatpush2.msra.mxu0 %v1120
      %1242 = vmatprep.subr.mxu0 0.0
      %1243 = vmatpush2.msra.mxu0 %v1119
      %1244 = vmatprep.subr.mxu0 0.0
      %1245 = vmatpush2.msra.mxu0 %v1118
      %1246 = vmatprep.subr.mxu0 0.0
      %1247 = vmatpush2.msra.mxu0 %v1117
      %1248 = vmatprep.subr.mxu0 0.0
      %1249 = vmatpush2.msra.mxu0 %v1116
      %1250 = vmatprep.subr.mxu0 0.0
      %1251 = vmatpush2.msra.mxu0 %v1115
      %1252 = vmatprep.subr.mxu0 0.0
      %1253 = vmatpush2.msra.mxu0 %v1114
      %1254 = vmatprep.subr.mxu0 0.0
      %1255 = vmatpush2.msra.mxu0 %v1113
      %1256 = vmatprep.subr.mxu0 0.0
      %1257 = vmatpush2.msra.mxu0 %v1112
      %1258 = vmatprep.subr.mxu0 0.0
      %1259 = vmatpush2.msra.mxu0 %v1111
      %1260 = vmatprep.subr.mxu0 0.0
      %1261 = vmatpush2.msra.mxu0 %v1110
      %1262 = vmatprep.subr.mxu0 0.0
      %1263 = vmatpush2.msra.mxu0 %v1109
      %1264 = vmatprep.mubr.f32.mxu0 %v274
      %1265 = vmatmul.mubr.f32.gmra.mxu0 %v273
      %v1266 = vpop.f32.mrf.mxu0
      %v1267 = vadd.f32 %v1192, %v1266
      %v1268 = vpop.f32.mrf.mxu0
      %1269 = vmatprep.mubr.f32.mxu0 %v278
      %1270 = vmatmul.mubr.f32.gmra.mxu0 %v277
      %v1271 = vpop.f32.mrf.mxu0
      %v1272 = vadd.f32 %v1197, %v1271
      %v1273 = vpop.f32.mrf.mxu0
      %1274 = vdwg.mxu0
      // Predicated region
      $region26: #{_density_map_jit.1} parent=24 // pred_check
        %p1275 = pneg %p20
      $region27: #{_density_map_jit.1} parent=24 // pred_check_branch
        %1277 = sbr.rel (%p1275) target = $region29
      $region28: #{_density_map_jit.1} parent=24 // pred_region
        %1278 = vst [vmem:[#allocation4] sm:$0xff] %v1267
        %1279 = vst [vmem:[#allocation4 + $0x8] sm:$0xff] %v1272
      $region29: #{_density_map_jit.1} parent=24 // pred_fallthru
        _
      %p1280 = scmp.ne.s32.totalorder 0, 0
      // Predicated region
      $region30: #{_density_map_jit.1} parent=24 // pred_check
        %p1281 = pneg %p1280
      $region31: #{_density_map_jit.1} parent=24 // pred_check_branch
        %1283 = sbr.rel (%p1281) target = $region33
      $region32: #{_density_map_jit.1} parent=24 // pred_region
        %v1284 = vld [vmem:[#allocation4] sm:$0xff]
        %v1285 = vld [vmem:[#allocation4 + $0x8] sm:$0xff]
        %v1286 = vadd.f32 %v1284, %v1267
        %v1287 = vadd.f32 %v1285, %v1272
        %1288 = vst [vmem:[#allocation4] sm:$0xff] %v1286
        %1289 = vst [vmem:[#allocation4 + $0x8] sm:$0xff] %v1287
      $region33: #{_density_map_jit.1} parent=24 // pred_fallthru
        _
    $region25: #{_density_map_jit.1} parent=1 // pred_fallthru
      _
    // Predicated region
    $region34: #{_density_map_jit.1} parent=1 // pred_check
      _
    $region35: #{_density_map_jit.1} parent=1 // pred_check_branch
      %1291 = sbr.rel (0) target = $region37
    $region36: #{_density_map_jit.1} parent=1 // pred_region
      %s1293 = ssub.s32 256, 256
      %1294 = vsyncadd [#allocation5], %s1293
      %s1295 = sshll.u32 [#allocation4], 4
      %s1296 = int_to_ptr.vmem [resolvable:$true] %s1295
      %1301 = dma.vmem_to_hbm [thread:$0]  %s1296, 256, %s5, [#allocation5], 128, 128, 8
    $region37: #{_density_map_jit.1} parent=1 // pred_fallthru
      _
    // Predicated region
    $region38: #{_density_map_jit.1} parent=1 // pred_check
      _
    $region39: #{_density_map_jit.1} parent=1 // pred_check_branch
      %1303 = sbr.rel (0) target = $region41
    $region40: #{_density_map_jit.1} parent=1 // pred_region
      %1304 = dma.done [#allocation5], 256
    $region41: #{_density_map_jit.1} parent=1 // pred_fallthru
      _
    %1305 = vsyncpa [#allocation5], 1

</llo_original>
